<compile_context>
chip_gen: v5e
topology: v5e:2x2
jax: 0.10.0
libtpu: 0.0.40
codegen_flags: <defaults>
</compile_context>

<pallas_src>
import jax
import jax.numpy as jnp
from jax import lax
from jax.experimental import pallas as pl
from jax.experimental.pallas import tpu as pltpu

n_embed = 128
num_experts = 8
top_k = 2


def _router_kernel(x_ref, w_ref, b_ref, out_ref, idx_ref):
    # x: (TN, D)  w: (E, D)  b: (E, 1)  out: (E, TN)  idx_packed: (1, TN)
    x = x_ref[...]
    w = w_ref[...]

    # (E, TN) = w @ x^T : contract the D axis of both operands, f32 MXU acc.
    logits = lax.dot_general(
        w, x, dimension_numbers=(((1,), (1,)), ((), ())),
        preferred_element_type=jnp.float32) + b_ref[...]

    E, TN = logits.shape
    e_iota = lax.broadcasted_iota(jnp.int32, (E, TN), 0)

    # Top-2 via expert(sublane)-axis reductions on the XLU (dense (E, TN)
    # VALU ops instead of a 1-of-8-sublane compare tree).  Lowest index wins
    # ties, matching torch.topk ordering.
    max1 = jnp.max(logits, axis=0, keepdims=True)                          # (1, TN)
    idx1 = jnp.min(jnp.where(logits == max1, e_iota, E), axis=0, keepdims=True)
    masked = jnp.where(e_iota == idx1, -jnp.inf, logits)
    max2 = jnp.max(masked, axis=0, keepdims=True)
    idx2 = jnp.min(jnp.where(masked == max2, e_iota, E), axis=0, keepdims=True)

    # Sparse softmax over the two kept logits (all others behave as -inf).
    # Exact reciprocal so the two probabilities sum to 1 (approx=True was the
    # source of the previous correctness failure; EUP is not the bottleneck).
    p2 = jnp.exp(max2 - max1)            # <= 1
    inv_denom = 1.0 / (1.0 + p2)
    prob1 = inv_denom
    prob2 = p2 * inv_denom

    out = jnp.where(e_iota == idx1, prob1,
                    jnp.where(e_iota == idx2, prob2, 0.0))
    out_ref[...] = out.astype(out_ref.dtype)
    # Pack (idx1, idx2) into a single lane-dense int32 row; unpacked by caller.
    idx_ref[...] = idx1 * E + idx2


def _round_up(x, m):
    return ((x + m - 1) // m) * m


def topk_router(mh_output, w, b, *, tile_n=None, expert_major=False):
    """mh_output: (B, T, D). w: (num_experts, D) nn.Linear weight; b: (num_experts,).

    Default (expert_major=False) returns PyTorch-parity layout:
        router_output (B, T, E) in mh_output.dtype, indices (B, T, top_k) int32.
    expert_major=True skips the relayout and returns the kernel's lane-dense
    layout directly: probs (E, B*T) and packed indices (B*T,) int32
    (idx1 * num_experts + idx2) for fused MoE-dispatch consumers.
    """
    B, T, D = mh_output.shape
    E = w.shape[0]
    N = B * T

    x2d = mh_output.reshape(N, D)              # keep caller's dtype, no pad copy
    w2d = jnp.asarray(w, x2d.dtype)            # (E, D)
    b2d = jnp.asarray(b, jnp.float32).reshape(E, 1)

    if tile_n is None:
        # Big tiles amortize the ~0.35 us per-grid-step overhead; keep >= 2
        # grid steps when N is large so the "parallel" token axis shards
        # across v7x's two TensorCores.  Always a multiple of 128 so the
        # output stores stay lane-dense.
        tile_n = min(8192, max(128, _round_up(pl.cdiv(N, 2), 128)))

    grid = (pl.cdiv(N, tile_n),)               # boundary block masked by Pallas

    out_itemsize = jnp.dtype(mh_output.dtype).itemsize
    # Double-buffered x tile + outputs (+ resident weight/bias).  Only lift
    # the scoped-VMEM limit when a (custom) tile would exceed v5e's 16 MiB
    # default; at the default tile cap (8192 f32) this stays well under it.
    vmem_need = (2 * tile_n * (D * x2d.dtype.itemsize + E * out_itemsize + 4)
                 + 2 * E * (D * x2d.dtype.itemsize + 4))
    cp_kwargs = dict(dimension_semantics=("parallel",))
    if vmem_need > (14 << 20):
        cp_kwargs["vmem_limit_bytes"] = int(vmem_need + (4 << 20))

    probs_en, idx_packed = pl.pallas_call(
        _router_kernel,
        out_shape=(
            jax.ShapeDtypeStruct((E, N), mh_output.dtype),
            jax.ShapeDtypeStruct((1, N), jnp.int32),
        ),
        grid_spec=pltpu.PrefetchScalarGridSpec(
            num_scalar_prefetch=0,
            grid=grid,
            in_specs=[
                pl.BlockSpec((tile_n, D), lambda i: (i, 0)),   # x tile
                pl.BlockSpec((E, D), lambda i: (0, 0)),        # weight (resident)
                pl.BlockSpec((E, 1), lambda i: (0, 0)),        # bias (resident)
            ],
            out_specs=[
                pl.BlockSpec((E, tile_n), lambda i: (0, i)),   # probs (E, TN)
                pl.BlockSpec((1, tile_n), lambda i: (0, i)),   # packed indices
            ],
        ),
        compiler_params=pltpu.CompilerParams(**cp_kwargs),
    )(x2d, w2d, b2d)

    if expert_major:
        return probs_en, idx_packed[0]

    # PyTorch-parity relayout (skip via expert_major=True if the consumer can
    # take the expert-major layout directly).
    router_output = probs_en.T.reshape(B, T, E)
    packed = idx_packed[0]
    indices = jnp.stack([packed // E, packed % E], axis=-1)
    indices = indices.reshape(B, T, top_k).astype(jnp.int32)
    return router_output, indices


def _init_linear(key, out_features, in_features):
    # deterministic, nn.Linear-like init (uniform in +/- 1/sqrt(fan_in))
    kw, kb = jax.random.split(key)
    bound = 1.0 / jnp.sqrt(in_features)
    w = jax.random.uniform(kw, (out_features, in_features), jnp.float32, -bound, bound)
    b = jax.random.uniform(kb, (out_features,), jnp.float32, -bound, bound)
    return w, b


def _reference(mh_output, w, b):
    # pure-JAX reference of the PyTorch forward, for sanity checking
    logits = jnp.einsum('btd,ed->bte', mh_output.astype(jnp.float32),
                        w.astype(jnp.float32)) + b.astype(jnp.float32)
    _, idx = lax.top_k(logits, top_k)
    keep = jax.nn.one_hot(idx, num_experts, dtype=jnp.float32).sum(axis=-2) > 0
    sparse = jnp.where(keep, logits, -jnp.inf)
    return jax.nn.softmax(sparse, axis=-1), idx


if __name__ == "__main__":
    key = jax.random.PRNGKey(0)
    k_x, k_l = jax.random.split(key)

    B, T = 2, 8
    mh_output = jax.random.normal(k_x, (B, T, n_embed), jnp.float32)
    w, b = _init_linear(k_l, num_experts, n_embed)

    router_output, indices = topk_router(mh_output, w, b)
    jax.block_until_ready(router_output)
    jax.block_until_ready(indices)

    ref_probs, ref_idx = _reference(mh_output, w, b)

    # sanity: rows sum to ~1, exactly top_k nonzeros, matches pure-JAX reference
    assert bool(jnp.allclose(router_output.sum(-1), 1.0, atol=1e-5))
    assert bool(jnp.all((router_output > 0).sum(-1) == top_k))
    assert bool(jnp.all(indices == ref_idx))
    assert bool(jnp.allclose(router_output, ref_probs, atol=1e-4))

    print("KERNEL_OK")
</pallas_src>

<mosaic_0001>
module attributes {stable_mosaic.version = 11 : i64} {
  func.func @_router_kernel(%arg0: i32, %arg1: memref<128x128xf32, #tpu.memory_space<vmem>>, %arg2: memref<8x128xf32, #tpu.memory_space<vmem>>, %arg3: memref<8x1xf32, #tpu.memory_space<vmem>>, %arg4: memref<8x128xf32, #tpu.memory_space<vmem>>, %arg5: memref<1x128xi32, #tpu.memory_space<vmem>>) attributes {dimension_semantics = [#tpu.dimension_semantics<parallel>], iteration_bounds = array<i64: 1>, scalar_prefetch = 0 : i64, scratch_operands = 0 : i64, tpu.core_type = #tpu.core_type<tc>, window_params = [{transform_indices = @transform_0, window_bounds = array<i64: 128, 128>}, {pipeline_mode = #tpu.pipeline_mode<synchronous>, transform_indices = @transform_1, window_bounds = array<i64: 8, 128>}, {pipeline_mode = #tpu.pipeline_mode<synchronous>, transform_indices = @transform_2, window_bounds = array<i64: 8, 1>}, {transform_indices = @transform_3, window_bounds = array<i64: 8, 128>}, {transform_indices = @transform_4, window_bounds = array<i64: 1, 128>}]} {
    %c0 = arith.constant 0 : index
    %c0_0 = arith.constant 0 : index
    %0 = vector.load %arg1[%c0, %c0_0] : memref<128x128xf32, #tpu.memory_space<vmem>>, vector<128x128xf32>
    %c0_1 = arith.constant 0 : index
    %c0_2 = arith.constant 0 : index
    %1 = vector.load %arg2[%c0_1, %c0_2] : memref<8x128xf32, #tpu.memory_space<vmem>>, vector<8x128xf32>
    %cst = arith.constant dense<0.000000e+00> : vector<8x128xf32>
    %2 = tpu.matmul %1, %0, %cst {dimension_numbers = #tpu.dot_dimension_numbers<[1], [1], [0], [0], [0, 0, 1, 0], [], []>} : vector<8x128xf32>, vector<128x128xf32>, vector<8x128xf32> -> vector<8x128xf32>
    %c0_3 = arith.constant 0 : index
    %c0_4 = arith.constant 0 : index
    %3 = vector.load %arg3[%c0_3, %c0_4] : memref<8x1xf32, #tpu.memory_space<vmem>>, vector<8x1xf32>
    %4 = vector.broadcast %3 : vector<8x1xf32> to vector<8x128xf32>
    %5 = arith.addf %2, %4 : vector<8x128xf32>
    %6 = tpu.iota {dimensions = array<i32: 0>} : vector<8x128xi32>
    %cst_5 = arith.constant dense<0xFF800000> : vector<128xf32>
    %7 = vector.multi_reduction <maximumf>, %5, %cst_5 [0] : vector<8x128xf32> to vector<128xf32>
    %8 = vector.shape_cast %7 : vector<128xf32> to vector<1x128xf32>
    %9 = vector.broadcast %8 : vector<1x128xf32> to vector<8x128xf32>
    %10 = arith.cmpf oeq, %5, %9 : vector<8x128xf32>
    %c8_i32 = arith.constant 8 : i32
    %11 = vector.broadcast %c8_i32 : i32 to vector<8x128xi32>
    %12 = arith.select %10, %6, %11 : vector<8x128xi1>, vector<8x128xi32>
    %cst_6 = arith.constant dense<2147483647> : vector<128xi32>
    %13 = vector.multi_reduction <minsi>, %12, %cst_6 [0] : vector<8x128xi32> to vector<128xi32>
    %14 = vector.shape_cast %13 : vector<128xi32> to vector<1x128xi32>
    %15 = vector.broadcast %14 : vector<1x128xi32> to vector<8x128xi32>
    %16 = arith.cmpi eq, %6, %15 : vector<8x128xi32>
    %cst_7 = arith.constant 0xFF800000 : f32
    %17 = vector.broadcast %cst_7 : f32 to vector<8x128xf32>
    %18 = arith.select %16, %17, %5 : vector<8x128xi1>, vector<8x128xf32>
    %cst_8 = arith.constant dense<0xFF800000> : vector<128xf32>
    %19 = vector.multi_reduction <maximumf>, %18, %cst_8 [0] : vector<8x128xf32> to vector<128xf32>
    %20 = vector.shape_cast %19 : vector<128xf32> to vector<1x128xf32>
    %21 = vector.broadcast %20 : vector<1x128xf32> to vector<8x128xf32>
    %22 = arith.cmpf oeq, %18, %21 : vector<8x128xf32>
    %c8_i32_9 = arith.constant 8 : i32
    %23 = vector.broadcast %c8_i32_9 : i32 to vector<8x128xi32>
    %24 = arith.select %22, %6, %23 : vector<8x128xi1>, vector<8x128xi32>
    %cst_10 = arith.constant dense<2147483647> : vector<128xi32>
    %25 = vector.multi_reduction <minsi>, %24, %cst_10 [0] : vector<8x128xi32> to vector<128xi32>
    %26 = vector.shape_cast %25 : vector<128xi32> to vector<1x128xi32>
    %27 = arith.subf %20, %8 : vector<1x128xf32>
    %28 = math.exp %27 : vector<1x128xf32>
    %cst_11 = arith.constant 1.000000e+00 : f32
    %29 = vector.broadcast %cst_11 : f32 to vector<1x128xf32>
    %30 = arith.addf %29, %28 : vector<1x128xf32>
    %cst_12 = arith.constant 1.000000e+00 : f32
    %31 = vector.broadcast %cst_12 : f32 to vector<1x128xf32>
    %32 = arith.divf %31, %30 : vector<1x128xf32>
    %33 = arith.mulf %28, %32 : vector<1x128xf32>
    %34 = vector.broadcast %14 : vector<1x128xi32> to vector<8x128xi32>
    %35 = arith.cmpi eq, %6, %34 : vector<8x128xi32>
    %36 = vector.broadcast %26 : vector<1x128xi32> to vector<8x128xi32>
    %37 = arith.cmpi eq, %6, %36 : vector<8x128xi32>
    %cst_13 = arith.constant 0.000000e+00 : f32
    %38 = vector.shape_cast %33 : vector<1x128xf32> to vector<1x128xf32>
    %39 = vector.broadcast %38 : vector<1x128xf32> to vector<8x128xf32>
    %40 = vector.broadcast %cst_13 : f32 to vector<8x128xf32>
    %41 = arith.select %37, %39, %40 : vector<8x128xi1>, vector<8x128xf32>
    %42 = vector.shape_cast %32 : vector<1x128xf32> to vector<1x128xf32>
    %43 = vector.broadcast %42 : vector<1x128xf32> to vector<8x128xf32>
    %44 = arith.select %35, %43, %41 : vector<8x128xi1>, vector<8x128xf32>
    %c0_14 = arith.constant 0 : index
    %c0_15 = arith.constant 0 : index
    %45 = vector.load %arg4[%c0_14, %c0_15] : memref<8x128xf32, #tpu.memory_space<vmem>>, vector<8x128xf32>
    tpu.vector_store %arg4[%c0_14, %c0_15], %44 {strides = array<i32>} : memref<8x128xf32, #tpu.memory_space<vmem>>, vector<8x128xf32>,
    %c8_i32_16 = arith.constant 8 : i32
    %46 = vector.broadcast %c8_i32_16 : i32 to vector<1x128xi32>
    %47 = arith.muli %14, %46 : vector<1x128xi32>
    %48 = arith.addi %47, %26 : vector<1x128xi32>
    %c0_17 = arith.constant 0 : index
    %c0_18 = arith.constant 0 : index
    %49 = vector.load %arg5[%c0_17, %c0_18] : memref<1x128xi32, #tpu.memory_space<vmem>>, vector<1x128xi32>
    tpu.vector_store %arg5[%c0_17, %c0_18], %48 {strides = array<i32>} : memref<1x128xi32, #tpu.memory_space<vmem>>, vector<1x128xi32>,
    return
  }
  func.func @transform_0(%arg0: i32) -> (i32, i32) {
    %c0_i32 = arith.constant 0 : i32
    %c0_i32_0 = arith.constant 0 : i32
    return %arg0, %c0_i32 : i32, i32
  }
  func.func @transform_1(%arg0: i32) -> (i32, i32) {
    %c0_i32 = arith.constant 0 : i32
    %c0_i32_0 = arith.constant 0 : i32
    %c0_i32_1 = arith.constant 0 : i32
    return %c0_i32, %c0_i32_0 : i32, i32
  }
  func.func @transform_2(%arg0: i32) -> (i32, i32) {
    %c0_i32 = arith.constant 0 : i32
    %c0_i32_0 = arith.constant 0 : i32
    %c0_i32_1 = arith.constant 0 : i32
    return %c0_i32, %c0_i32_0 : i32, i32
  }
  func.func @transform_3(%arg0: i32) -> (i32, i32) {
    %c0_i32 = arith.constant 0 : i32
    %c0_i32_0 = arith.constant 0 : i32
    return %c0_i32, %arg0 : i32, i32
  }
  func.func @transform_4(%arg0: i32) -> (i32, i32) {
    %c0_i32 = arith.constant 0 : i32
    %c0_i32_0 = arith.constant 0 : i32
    return %c0_i32, %arg0 : i32, i32
  }
}

</mosaic_0001>

<llo_original>
// kernel: tpu_custom_call.1
$region0: #{tpu_custom_call.1}
  #allocation0 [shape = 'u32[]', space=smem, size = 0x4, offset = 0x4, fixed_abs, tag = 'smem constant byte address 0x4 - core index']
  #allocation1 [shape = 'u32[72,128]{1,0:T(1,128)}', space=vmem, size = 0x9000, scoped, tag = 'internal scratch']
  %s0 = inlined_call_operand.hbm [shape: f32[16,128], index: 0, kind: input, shape index: {}]
  %s1 = inlined_call_operand.vmem [shape: f32[8,128], index: 1, kind: input, shape index: {}]
  %s2 = inlined_call_operand.vmem [shape: f32[8,1], index: 2, kind: input, shape index: {}]
  %s3 = inlined_call_operand.hbm [shape: f32[8,16], index: 3, kind: output, shape index: {0}]
  %s4 = inlined_call_operand.hbm [shape: s32[1,16], index: 4, kind: output, shape index: {1}]
  %5 = xla_tuple %s3, %s4
  %s6 = sld [smem:[#allocation0]]
  $region34: #{tpu_custom_call.1} parent=0
    _
  %s8 = ssub.s32 1, %s6
  %s9 = scalar_select 0, %s8, %s6
  $region1: #{tpu_custom_call.1} parent=0
    #allocation2 [shape = 'u8[65536]{0}', space=vmem, size = 0x10000, scoped, tag = 'input window, operand 0, single buffered']
    #allocation3 [shape = 's32[1]{0}', space=sflag, size = 0x4, scoped, tag = 'scoped memory for tpu_custom_call.1']
    #allocation4 [shape = 's32[1]{0}', space=sflag, size = 0x4, scoped, tag = 'scoped memory for tpu_custom_call.1']
    #allocation5 [shape = 'u8[4096]{0}', space=vmem, size = 0x1000, scoped, tag = 'output window, operand 0, single buffered']
    #allocation6 [shape = 'u8[512]{0}', space=vmem, size = 0x400, scoped, tag = 'output window, operand 1, single buffered']
    #allocation7 [shape = 's32[1]{0}', space=sflag, size = 0x4, scoped, tag = 'scoped memory for tpu_custom_call.1']
    %10 = vsyncpa [#allocation3], 0
    %11 = vsyncpa [#allocation4], 0
    %12 = vsyncpa [#allocation7], 0
    // Predicated region
    $region2: #{tpu_custom_call.1} parent=1 // pred_check
      _
    $region3: #{tpu_custom_call.1} parent=1 // pred_check_branch
      %14 = sbr.rel (0) target = $region5
    $region4: #{tpu_custom_call.1} parent=1 // pred_region
      %16 = vsyncadd [#allocation3], 1792
      %s17 = sshll.u32 %s0, 4
      %s18 = int_to_ptr.hbm [resolvable:$true] %s17
      %s19 = sshll.u32 [#allocation2], 4
      %s20 = int_to_ptr.vmem [resolvable:$true] %s19
      %25 = dma.hbm_to_vmem [thread:$0]  %s18, 256, %s20, [#allocation3], 128, 128, 8
    $region5: #{tpu_custom_call.1} parent=1 // pred_fallthru
      _
    // Predicated region
    $region6: #{tpu_custom_call.1} parent=1 // pred_check
      _
    $region7: #{tpu_custom_call.1} parent=1 // pred_check_branch
      %27 = sbr.rel (0) target = $region9
    $region8: #{tpu_custom_call.1} parent=1 // pred_region
      _
    $region9: #{tpu_custom_call.1} parent=1 // pred_fallthru
      _
    // Predicated region
    $region10: #{tpu_custom_call.1} parent=1 // pred_check
      _
    $region11: #{tpu_custom_call.1} parent=1 // pred_check_branch
      %29 = sbr.rel (0) target = $region13
    $region12: #{tpu_custom_call.1} parent=1 // pred_region
      _
    $region13: #{tpu_custom_call.1} parent=1 // pred_fallthru
      _
    // Predicated region
    $region14: #{tpu_custom_call.1} parent=1 // pred_check
      _
    $region15: #{tpu_custom_call.1} parent=1 // pred_check_branch
      %31 = sbr.rel (0) target = $region17
    $region16: #{tpu_custom_call.1} parent=1 // pred_region
      %33 = dma.done [#allocation3], 2048
    $region17: #{tpu_custom_call.1} parent=1 // pred_fallthru
      _
    %v34 = vld [vmem:[#allocation2] sm:$0xff]
    %v35 = vld [vmem:[#allocation2 + $0x8] sm:$0xff]
    %v36 = vld [vmem:[#allocation2 + $0x10] sm:$0xff]
    %v37 = vld [vmem:[#allocation2 + $0x18] sm:$0xff]
    %v38 = vld [vmem:[#allocation2 + $0x20] sm:$0xff]
    %v39 = vld [vmem:[#allocation2 + $0x28] sm:$0xff]
    %v40 = vld [vmem:[#allocation2 + $0x30] sm:$0xff]
    %v41 = vld [vmem:[#allocation2 + $0x38] sm:$0xff]
    %v42 = vld [vmem:[#allocation2 + $0x40] sm:$0xff]
    %v43 = vld [vmem:[#allocation2 + $0x48] sm:$0xff]
    %v44 = vld [vmem:[#allocation2 + $0x50] sm:$0xff]
    %v45 = vld [vmem:[#allocation2 + $0x58] sm:$0xff]
    %v46 = vld [vmem:[#allocation2 + $0x60] sm:$0xff]
    %v47 = vld [vmem:[#allocation2 + $0x68] sm:$0xff]
    %v48 = vld [vmem:[#allocation2 + $0x70] sm:$0xff]
    %v49 = vld [vmem:[#allocation2 + $0x78] sm:$0xff]
    %v50 = vld [vmem:[%s1] sm:$0xff]
    %v51 = vld [vmem:[%s2] sm:$0xff]
    %53 = vset.pattern.permute.xlu0 0
    %54 = vperm.xlu0 %53, %v51
    %v55 = vpop.permute.xlu0 %54
    %57 = vmatpush.xpose.msra.mxu0 %v49
    %58 = vmatpush.xpose.msra.mxu0 %v48
    %59 = vmatpush.xpose.msra.mxu0 %v47
    %60 = vmatpush.xpose.msra.mxu0 %v46
    %61 = vmatpush.xpose.msra.mxu0 %v45
    %62 = vmatpush.xpose.msra.mxu0 %v44
    %63 = vmatpush.xpose.msra.mxu0 %v43
    %64 = vmatpush.xpose.msra.mxu0 %v42
    %65 = vmatpush.xpose.msra.mxu0 %v41
    %66 = vmatpush.xpose.msra.mxu0 %v40
    %67 = vmatpush.xpose.msra.mxu0 %v39
    %68 = vmatpush.xpose.msra.mxu0 %v38
    %69 = vmatpush.xpose.msra.mxu0 %v37
    %70 = vmatpush.xpose.msra.mxu0 %v36
    %71 = vmatpush.xpose.msra.mxu0 %v35
    %72 = vmatpush.xpose.msra.mxu0 %v34
    %73 = vmatmul.f32.gmra.mxu0 %v50
    %v74 = vpop.f32.mrf.mxu0
    %v75 = vadd.f32 %v55, %v74
    %76 = vdwg.mxu0
    %v77 = vlaneseq
    %v78 = vshrl.u32 %v77, 7
    %v79 = vrot.slane %v75, 4
    %v80 = vmax.f32 %v75, %v79
    %v81 = vrot.slane %v80, 2
    %v82 = vmax.f32 %v80, %v81
    %v83 = vrot.slane %v82, 1
    %v84 = vmax.f32 %v82, %v83
    %vm85 = vcmp.eq.f32.partialorder %v75, %v84
    %v86 = vsel %vm85, %v78, 8
    %v87 = vrot.slane %v86, 4
    %vm88 = vcmp.lt.s32.totalorder %v86, %v87
    %v89 = vsel %vm88, %v86, %v87
    %v90 = vrot.slane %v89, 2
    %vm91 = vcmp.lt.s32.totalorder %v89, %v90
    %v92 = vsel %vm91, %v89, %v90
    %v93 = vrot.slane %v92, 1
    %vm94 = vcmp.lt.s32.totalorder %v92, %v93
    %v95 = vsel %vm94, %v92, %v93
    %vm96 = vcmp.eq.s32.totalorder %v78, %v95
    %v97 = vsel %vm96, -inf, %v75
    %v98 = vrot.slane %v97, 4
    %v99 = vmax.f32 %v97, %v98
    %v100 = vrot.slane %v99, 2
    %v101 = vmax.f32 %v99, %v100
    %v102 = vrot.slane %v101, 1
    %v103 = vmax.f32 %v101, %v102
    %vm104 = vcmp.eq.f32.partialorder %v97, %v103
    %v105 = vsel %vm104, %v78, 8
    %v106 = vrot.slane %v105, 4
    %vm107 = vcmp.lt.s32.totalorder %v105, %v106
    %v108 = vsel %vm107, %v105, %v106
    %v109 = vrot.slane %v108, 2
    %vm110 = vcmp.lt.s32.totalorder %v108, %v109
    %v111 = vsel %vm110, %v108, %v109
    %v112 = vrot.slane %v111, 1
    %vm113 = vcmp.lt.s32.totalorder %v111, %v112
    %v114 = vsel %vm113, %v111, %v112
    %v115 = vsub.f32 %v103, %v84
    %v116 = vmul.f32 %v115, 1.442695
    %v117 = vpow.pop %v116
    %v118 = vadd.f32 %v117, 1.0
    %v119 = vrcp.pop %v118
    %v120 = vmul.f32 %v118, %v119
    %v121 = vsub.f32 1.0, %v120
    %v122 = vmul.f32 %v119, %v121
    %v123 = vadd.f32 %v119, %v122
    %vm124 = vweird.f32 %v118
    %vm125 = vweird.f32 %v119
    %vm126 = vmor %vm124, %vm125
    %v127 = vsel %vm126, %v119, %v123
    %v128 = vand.u32 2147483647, %v118
    %vm129 = vcmp.eq.f32.partialorder %v128, 8.507059e+37
    %v130 = vand.u32 %v118, 2147483648
    %v131 = vor.u32 1.1754944e-38, %v130
    %v132 = vsel %vm129, %v131, %v127
    %v133 = vmul.f32 1.0, %v132
    %v134 = vmul.f32 %v117, %v133
    %vm135 = vcmp.eq.s32.totalorder %v78, %v114
    %v136 = vsel %vm135, %v134, 0.0
    %v137 = vsel %vm96, %v133, %v136
    %138 = vst [vmem:[#allocation5] sm:$0xff] %v137
    %v139 = vmul.u32 %v95, 8
    %v140 = vadd.s32 %v139, %v114
    %141 = vst [vmem:[#allocation6] sm:$0x1] %v140
    // Predicated region
    $region18: #{tpu_custom_call.1} parent=1 // pred_check
      _
    $region19: #{tpu_custom_call.1} parent=1 // pred_check_branch
      %143 = sbr.rel (0) target = $region21
    $region20: #{tpu_custom_call.1} parent=1 // pred_region
      %145 = vsyncadd [#allocation4], 0
      %s147 = sshll.u32 [#allocation5], 4
      %s148 = int_to_ptr.vmem [resolvable:$true] %s147
      %s149 = sshll.u32 %s3, 4
      %s150 = int_to_ptr.hbm [resolvable:$true] %s149
      %152 = dma.vmem_to_hbm [thread:$0]  %s148, 128, %s150, [#allocation4]
    $region21: #{tpu_custom_call.1} parent=1 // pred_fallthru
      _
    // Predicated region
    $region22: #{tpu_custom_call.1} parent=1 // pred_check
      _
    $region23: #{tpu_custom_call.1} parent=1 // pred_check_branch
      %154 = sbr.rel (0) target = $region25
    $region24: #{tpu_custom_call.1} parent=1 // pred_region
      %156 = vsyncadd [#allocation7], 0
      %s158 = sshll.u32 [#allocation6], 4
      %s159 = int_to_ptr.vmem [resolvable:$true] %s158
      %s160 = sshll.u32 %s4, 4
      %s161 = int_to_ptr.hbm [resolvable:$true] %s160
      %163 = dma.vmem_to_hbm [thread:$0]  %s159, 16, %s161, [#allocation7]
    $region25: #{tpu_custom_call.1} parent=1 // pred_fallthru
      _
    // Predicated region
    $region26: #{tpu_custom_call.1} parent=1 // pred_check
      _
    $region27: #{tpu_custom_call.1} parent=1 // pred_check_branch
      %165 = sbr.rel (0) target = $region29
    $region28: #{tpu_custom_call.1} parent=1 // pred_region
      %167 = dma.done [#allocation4], 128
    $region29: #{tpu_custom_call.1} parent=1 // pred_fallthru
      _
    // Predicated region
    $region30: #{tpu_custom_call.1} parent=1 // pred_check
      _
    $region31: #{tpu_custom_call.1} parent=1 // pred_check_branch
      %169 = sbr.rel (0) target = $region33
    $region32: #{tpu_custom_call.1} parent=1 // pred_region
      %171 = dma.done [#allocation7], 16
    $region33: #{tpu_custom_call.1} parent=1 // pred_fallthru
      _
    %172 = vsyncpa [#allocation3], 1
    %173 = vsyncpa [#allocation4], 1
    %174 = vsyncpa [#allocation7], 1

</llo_original>
